<compile_context>
chip_gen: v7x
topology: tpu7x:2x2x1
jax: 0.10.0
libtpu: 0.0.40
codegen_flags: <defaults>
</compile_context>

<pallas_src>
import functools

import jax
import jax.numpy as jnp
from jax.experimental import pallas as pl
from jax.experimental.pallas import tpu as pltpu


_PARALLEL = getattr(pltpu, "PARALLEL", "parallel")
_ARBITRARY = getattr(pltpu, "ARBITRARY", "arbitrary")
_CORE_PARALLEL = getattr(pltpu, "CORE_PARALLEL", None)


def _round_up(n, m):
    return ((n + m - 1) // m) * m


def _tpu_vmem_capacity():
    """Physical VMEM bytes, and whether the query actually succeeded."""
    try:
        return int(pltpu.get_tpu_info().vmem_capacity_bytes), True
    except Exception:
        return 64 * 1024 * 1024, False  # conservative (v7x-sized) fallback


def _choose_tm(T, vmem_cap, sub):
    """Row-tile size: large enough to amortize ~0.35us per grid step, bounded by the
    VMEM class, and picked to limit padded-row waste when T is not much larger than it."""
    max_tm = 512 if vmem_cap >= (96 << 20) else 256   # cap at 256 on 64 MiB (v7x) parts
    if T <= 128:
        return max(_round_up(T, sub), sub)
    cands = [c for c in (128, 192, 256, 384, 512) if c <= max_tm]

    # cost model: padded rows processed + ~32 rows-equivalent of fixed per-step overhead
    def cost(c):
        steps = -(-T // c)
        return steps * c + 32 * steps

    return min(cands, key=lambda c: (cost(c), -c))


def _choose_f_tile(tm, d_in_p, f_p, d_out_p, vmem_limit, wbytes, xbytes, single_buffer):
    """Largest F chunk (multiple of 128) whose working set fits the VMEM budget."""
    usable = vmem_limit - (8 << 20)                   # margin for Mosaic-internal scratch
    fixed = (2 * tm * d_in_p * xbytes                 # double-buffered x tiles
             + 2 * tm * d_out_p * 4                   # double-buffered f32 out tiles
             + tm * d_out_p * 4)                      # f32 accumulator scratch
    wfac = 1 if single_buffer else 2
    # fully-resident weights + the (tm, F) hidden intermediate (f32 + its cast copy)
    resident = wfac * (d_in_p + d_out_p) * f_p * wbytes + tm * f_p * (4 + wbytes) + fixed
    if resident <= usable:
        return f_p
    per_f = 2 * (d_in_p + d_out_p) * wbytes + tm * (4 + wbytes)   # per F column, chunked
    tf = (usable - fixed) // per_f
    tf = max(128, (int(tf) // 128) * 128)
    return int(min(tf, f_p))


def _ffn_kernel(x_ref, keep_ref, w1_ref, b1_ref, w2_ref, b2_ref, o_ref, acc_ref, *,
                compute_dtype):
    f = pl.program_id(1)

    @pl.when(f == 0)
    def _init():
        acc_ref[...] = jnp.zeros_like(acc_ref)

    # Linear -> ReLU for this F chunk (compute_dtype MXU operands, f32 accumulation).
    h = jnp.dot(x_ref[...].astype(compute_dtype), w1_ref[...],
                preferred_element_type=jnp.float32)
    h = jnp.maximum(h + b1_ref[...], 0.0)
    # dropout: identity (eval mode)
    acc_ref[...] += jnp.dot(h.astype(compute_dtype), w2_ref[...],
                            preferred_element_type=jnp.float32)

    @pl.when(f == pl.num_programs(1) - 1)
    def _finalize():
        y = jnp.maximum(acc_ref[...] + b2_ref[...], 0.0)
        # keep_ref is a wrapper-precomputed f32 {0,1} column -> exact zeros for pad rows.
        o_ref[...] = (y * keep_ref[...]).astype(o_ref.dtype)


def pos_wise_ffn(x, w1, b1, w2, b2, *, padding_value=0.0, token_tile=None, f_tile=None,
                 compute_dtype=jnp.bfloat16, x_stream_dtype=None, out_dtype=jnp.float32,
                 single_buffer_weights=True, core_parallel=None):
    """x: (B, S, D_in) float32. w1: (D_in, F), w2: (F, D_out). Returns (B, S, D_out)."""
    B, S, D_in = x.shape
    F = w1.shape[1]
    D_out = w2.shape[1]
    T = B * S
    if x_stream_dtype is None:
        x_stream_dtype = compute_dtype
    wbytes = jnp.dtype(compute_dtype).itemsize
    xbytes = jnp.dtype(x_stream_dtype).itemsize
    sub = 8 if xbytes == 4 else (16 if xbytes == 2 else 32)   # sublane packing granule

    vmem_cap, vmem_known = _tpu_vmem_capacity()
    vmem_limit = int(max(vmem_cap - (16 << 20), (vmem_cap * 3) // 4))
    if core_parallel is None:
        # v7x-sized VMEM (64 MiB per TC) implies 2 TensorCores worth sharding rows over.
        core_parallel = vmem_known and vmem_cap <= (64 << 20)

    # Lane-dense padded feature dims (multiples of 128) -> unmasked full-lane stores.
    D_in_p = _round_up(D_in, 128)
    D_out_p = _round_up(D_out, 128)
    F_p128 = _round_up(F, 128)

    if token_tile is None:
        tm = _choose_tm(T, vmem_cap, sub)
    else:
        tm = _round_up(min(token_tile, _round_up(T, sub)), sub)
    tm = max(tm, sub)
    T_p = _round_up(T, tm)

    if f_tile is None:
        tf = _choose_f_tile(tm, D_in_p, F_p128, D_out_p, vmem_limit, wbytes, xbytes,
                            single_buffer_weights)
    else:
        tf = min(_round_up(f_tile, 128), F_p128)
    F_p = _round_up(F, tf)            # tf is a multiple of 128, so tf divides F_p
    num_f = F_p // tf

    # Padding mask from the ORIGINAL (f32) features; never recomputed on narrowed data.
    x2 = x.reshape(T, D_in)
    keep = jnp.logical_not(
        jnp.all(x2 == padding_value, axis=-1, keepdims=True)).astype(jnp.float32)
    x2 = x2.astype(x_stream_dtype)
    if (T_p, D_in_p) != (T, D_in):
        x2 = jnp.pad(x2, ((0, T_p - T), (0, D_in_p - D_in)))
    if T_p != T:
        keep = jnp.pad(keep, ((0, T_p - T), (0, 0)))

    # Zero-padded weights/biases: padded rows/cols contribute exactly 0 to every dot,
    # and fully-padded F chunks give relu(0 + 0) = 0 -> no-op contributions.
    w1_p = jnp.pad(w1, ((0, D_in_p - D_in), (0, F_p - F))).astype(compute_dtype)
    w2_p = jnp.pad(w2, ((0, F_p - F), (0, D_out_p - D_out))).astype(compute_dtype)
    b1_p = jnp.pad(b1, (0, F_p - F)).reshape(1, F_p).astype(jnp.float32)
    b2_p = jnp.pad(b2, (0, D_out_p - D_out)).reshape(1, D_out_p).astype(jnp.float32)

    kernel = functools.partial(_ffn_kernel, compute_dtype=compute_dtype)

    def _build(row_sem, sbw):
        def spec(shape, idx, constant_index):
            if sbw and constant_index:
                # Block index never changes across the grid -> one resident copy.
                return pl.BlockSpec(shape, idx, pipeline_mode=pl.Buffered(1))
            return pl.BlockSpec(shape, idx)

        grid_spec = pltpu.PrefetchScalarGridSpec(
            num_scalar_prefetch=0,
            grid=(T_p // tm, num_f),
            in_specs=[
                pl.BlockSpec((tm, D_in_p), lambda i, f: (i, 0)),        # x row tile
                pl.BlockSpec((tm, 1), lambda i, f: (i, 0)),             # keep-mask column
                spec((D_in_p, tf), lambda i, f: (0, f), num_f == 1),    # W1 chunk
                spec((1, tf), lambda i, f: (0, f), num_f == 1),         # b1 chunk
                spec((tf, D_out_p), lambda i, f: (f, 0), num_f == 1),   # W2 chunk
                spec((1, D_out_p), lambda i, f: (0, 0), True),          # b2
            ],
            out_specs=pl.BlockSpec((tm, D_out_p), lambda i, f: (i, 0)),
            scratch_shapes=[pltpu.VMEM((tm, D_out_p), jnp.float32)],
        )
        return pl.pallas_call(
            kernel,
            out_shape=jax.ShapeDtypeStruct((T_p, D_out_p), out_dtype),
            grid_spec=grid_spec,
            compiler_params=pltpu.CompilerParams(
                dimension_semantics=(row_sem, _ARBITRARY),
                vmem_limit_bytes=vmem_limit),
        )

    # Config ladder: (CORE_PARALLEL if v7x-sized) -> PARALLEL -> PARALLEL w/o Buffered(1).
    configs = []
    if core_parallel and _CORE_PARALLEL is not None:
        configs.append((_CORE_PARALLEL, single_buffer_weights))
    configs.append((_PARALLEL, single_buffer_weights))
    if single_buffer_weights:
        configs.append((_PARALLEL, False))

    last_err = None
    for row_sem, sbw in configs:
        try:
            out2 = _build(row_sem, sbw)(x2, keep, w1_p, b1_p, w2_p, b2_p)
            return out2[:T, :D_out].reshape(B, S, D_out)
        except Exception as e:  # fall through to the next, more conservative config
            last_err = e
    raise last_err


def _xavier_uniform(key, shape, gain):
    fan_in, fan_out = shape
    bound = gain * (6.0 / (fan_in + fan_out)) ** 0.5
    return jax.random.uniform(key, shape, jnp.float32, minval=-bound, maxval=bound)


if __name__ == "__main__":
    # Small shapes consistent with the module's forward.
    batch, seq = 2, 8
    input_size, filter_size, output_size = 32, 256, 64
    padding_value = 0.0

    key = jax.random.PRNGKey(0)
    kx, k1, k2 = jax.random.split(key, 3)

    x = jax.random.normal(kx, (batch, seq, input_size), jnp.float32)
    # a couple of all-padding tokens exercise the mask path
    x = x.at[0, 3, :].set(padding_value)
    x = x.at[1, 7, :].set(padding_value)

    relu_gain = 2.0 ** 0.5  # nn.init.calculate_gain('relu')
    # Stored transposed vs PyTorch: w1 is (input_size, filter_size) so y = x @ w1.
    w1 = _xavier_uniform(k1, (input_size, filter_size), relu_gain)
    b1 = jnp.zeros((filter_size,), jnp.float32)
    w2 = _xavier_uniform(k2, (filter_size, output_size), relu_gain)
    b2 = jnp.zeros((output_size,), jnp.float32)

    # Pure-JAX reference with the same bf16-operand matmuls (f32 accumulate, eval dropout).
    x2 = x.reshape(-1, input_size)
    h_ref = jnp.maximum(
        jnp.dot(x2.astype(jnp.bfloat16), w1.astype(jnp.bfloat16),
                preferred_element_type=jnp.float32) + b1, 0.0)
    y_ref = jnp.maximum(
        jnp.dot(h_ref.astype(jnp.bfloat16), w2.astype(jnp.bfloat16),
                preferred_element_type=jnp.float32) + b2, 0.0)
    is_pad = jnp.all(x2 == padding_value, axis=-1, keepdims=True)
    ref = jnp.where(is_pad, 0.0, y_ref).reshape(batch, seq, output_size)

    # 1) default path: weights fully resident, single F chunk.
    out = jax.block_until_ready(
        pos_wise_ffn(x, w1, b1, w2, b2, padding_value=padding_value))
    assert out.shape == ref.shape
    assert jnp.allclose(out, ref, atol=2e-2, rtol=2e-2), "mismatch (resident path)"
    assert jnp.all(out[0, 3] == 0.0) and jnp.all(out[1, 7] == 0.0)

    # 2) streamed-weight path: force F chunking to exercise the accumulator init/finalize.
    out_c = jax.block_until_ready(
        pos_wise_ffn(x, w1, b1, w2, b2, padding_value=padding_value, f_tile=128))
    assert jnp.allclose(out_c, ref, atol=2e-2, rtol=2e-2), "mismatch (F-chunked path)"
    assert jnp.all(out_c[0, 3] == 0.0) and jnp.all(out_c[1, 7] == 0.0)

    print("KERNEL_OK")
</pallas_src>

<mosaic_0001>
module attributes {stable_mosaic.version = 11 : i64} {
  func.func @_ffn_kernel(%arg0: i32, %arg1: i32, %arg2: memref<16x128xbf16, #tpu.memory_space<vmem>>, %arg3: memref<16x1xf32, #tpu.memory_space<vmem>>, %arg4: memref<128x256xbf16, #tpu.memory_space<vmem>>, %arg5: memref<1x256xf32, #tpu.memory_space<vmem>>, %arg6: memref<256x128xbf16, #tpu.memory_space<vmem>>, %arg7: memref<1x128xf32, #tpu.memory_space<vmem>>, %arg8: memref<16x128xf32, #tpu.memory_space<vmem>>, %arg9: memref<16x128xf32, #tpu.memory_space<vmem>>) attributes {dimension_semantics = [#tpu.dimension_semantics<parallel>, #tpu.dimension_semantics<arbitrary>], iteration_bounds = array<i64: 1, 1>, scalar_prefetch = 0 : i64, scratch_operands = 1 : i64, tpu.core_type = #tpu.core_type<tc>, window_params = [{transform_indices = @transform_0, window_bounds = array<i64: 16, 128>}, {transform_indices = @transform_1, window_bounds = array<i64: 16, 1>}, {pipeline_mode = #tpu.pipeline_mode<synchronous>, transform_indices = @transform_2, window_bounds = array<i64: 128, 256>}, {pipeline_mode = #tpu.pipeline_mode<synchronous>, transform_indices = @transform_3, window_bounds = array<i64: 1, 256>}, {pipeline_mode = #tpu.pipeline_mode<synchronous>, transform_indices = @transform_4, window_bounds = array<i64: 256, 128>}, {pipeline_mode = #tpu.pipeline_mode<synchronous>, transform_indices = @transform_5, window_bounds = array<i64: 1, 128>}, {transform_indices = @transform_6, window_bounds = array<i64: 16, 128>}]} {
    %c0_i32 = arith.constant 0 : i32
    %0 = arith.cmpi eq, %arg1, %c0_i32 : i32
    %1 = arith.extui %0 : i1 to i32
    %c0_i32_0 = arith.constant 0 : i32
    %2 = arith.cmpi ne, %1, %c0_i32_0 : i32
    scf.if %2 {
      %cst_16 = arith.constant 0.000000e+00 : f32
      %20 = vector.broadcast %cst_16 : f32 to vector<16x128xf32>
      %c0_17 = arith.constant 0 : index
      %c0_18 = arith.constant 0 : index
      %21 = vector.load %arg9[%c0_17, %c0_18] : memref<16x128xf32, #tpu.memory_space<vmem>>, vector<16x128xf32>
      tpu.vector_store %arg9[%c0_17, %c0_18], %20 {strides = array<i32>} : memref<16x128xf32, #tpu.memory_space<vmem>>, vector<16x128xf32>,
    } else {
    }
    %c0 = arith.constant 0 : index
    %c0_1 = arith.constant 0 : index
    %3 = vector.load %arg2[%c0, %c0_1] : memref<16x128xbf16, #tpu.memory_space<vmem>>, vector<16x128xbf16>
    %c0_2 = arith.constant 0 : index
    %c0_3 = arith.constant 0 : index
    %4 = vector.load %arg4[%c0_2, %c0_3] : memref<128x256xbf16, #tpu.memory_space<vmem>>, vector<128x256xbf16>
    %cst = arith.constant dense<0.000000e+00> : vector<16x256xf32>
    %5 = tpu.matmul %3, %4, %cst {dimension_numbers = #tpu.dot_dimension_numbers<[1], [0], [0], [1], [0, 0, 1, 1], [], []>} : vector<16x128xbf16>, vector<128x256xbf16>, vector<16x256xf32> -> vector<16x256xf32>
    %c0_4 = arith.constant 0 : index
    %c0_5 = arith.constant 0 : index
    %6 = vector.load %arg5[%c0_4, %c0_5] : memref<1x256xf32, #tpu.memory_space<vmem>>, vector<1x256xf32>
    %7 = vector.broadcast %6 : vector<1x256xf32> to vector<16x256xf32>
    %8 = arith.addf %5, %7 : vector<16x256xf32>
    %cst_6 = arith.constant 0.000000e+00 : f32
    %9 = vector.broadcast %cst_6 : f32 to vector<16x256xf32>
    %10 = arith.maximumf %8, %9 : vector<16x256xf32>
    %c0_7 = arith.constant 0 : index
    %c0_8 = arith.constant 0 : index
    %11 = vector.load %arg9[%c0_7, %c0_8] : memref<16x128xf32, #tpu.memory_space<vmem>>, vector<16x128xf32>
    %12 = arith.truncf %10 : vector<16x256xf32> to vector<16x256xbf16>
    %c0_9 = arith.constant 0 : index
    %c0_10 = arith.constant 0 : index
    %13 = vector.load %arg6[%c0_9, %c0_10] : memref<256x128xbf16, #tpu.memory_space<vmem>>, vector<256x128xbf16>
    %cst_11 = arith.constant dense<0.000000e+00> : vector<16x128xf32>
    %14 = tpu.matmul %12, %13, %cst_11 {dimension_numbers = #tpu.dot_dimension_numbers<[1], [0], [0], [1], [0, 0, 1, 1], [], []>} : vector<16x256xbf16>, vector<256x128xbf16>, vector<16x128xf32> -> vector<16x128xf32>
    %15 = arith.addf %11, %14 : vector<16x128xf32>
    %c0_12 = arith.constant 0 : index
    %c0_13 = arith.constant 0 : index
    %16 = vector.load %arg9[%c0_12, %c0_13] : memref<16x128xf32, #tpu.memory_space<vmem>>, vector<16x128xf32>
    tpu.vector_store %arg9[%c0_12, %c0_13], %15 {strides = array<i32>} : memref<16x128xf32, #tpu.memory_space<vmem>>, vector<16x128xf32>,
    %c0_i32_14 = arith.constant 0 : i32
    %17 = arith.cmpi eq, %arg1, %c0_i32_14 : i32
    %18 = arith.extui %17 : i1 to i32
    %c0_i32_15 = arith.constant 0 : i32
    %19 = arith.cmpi ne, %18, %c0_i32_15 : i32
    scf.if %19 {
      %c0_16 = arith.constant 0 : index
      %c0_17 = arith.constant 0 : index
      %20 = vector.load %arg9[%c0_16, %c0_17] : memref<16x128xf32, #tpu.memory_space<vmem>>, vector<16x128xf32>
      %c0_18 = arith.constant 0 : index
      %c0_19 = arith.constant 0 : index
      %21 = vector.load %arg7[%c0_18, %c0_19] : memref<1x128xf32, #tpu.memory_space<vmem>>, vector<1x128xf32>
      %22 = vector.broadcast %21 : vector<1x128xf32> to vector<16x128xf32>
      %23 = arith.addf %20, %22 : vector<16x128xf32>
      %cst_20 = arith.constant 0.000000e+00 : f32
      %24 = vector.broadcast %cst_20 : f32 to vector<16x128xf32>
      %25 = arith.maximumf %23, %24 : vector<16x128xf32>
      %c0_21 = arith.constant 0 : index
      %c0_22 = arith.constant 0 : index
      %26 = vector.load %arg3[%c0_21, %c0_22] : memref<16x1xf32, #tpu.memory_space<vmem>>, vector<16x1xf32>
      %27 = vector.broadcast %26 : vector<16x1xf32> to vector<16x128xf32>
      %28 = arith.mulf %25, %27 : vector<16x128xf32>
      %c0_23 = arith.constant 0 : index
      %c0_24 = arith.constant 0 : index
      %29 = vector.load %arg8[%c0_23, %c0_24] : memref<16x128xf32, #tpu.memory_space<vmem>>, vector<16x128xf32>
      tpu.vector_store %arg8[%c0_23, %c0_24], %28 {strides = array<i32>} : memref<16x128xf32, #tpu.memory_space<vmem>>, vector<16x128xf32>,
    } else {
    }
    return
  }
  func.func @transform_0(%arg0: i32, %arg1: i32) -> (i32, i32) {
    %c0_i32 = arith.constant 0 : i32
    %c0_i32_0 = arith.constant 0 : i32
    return %arg0, %c0_i32 : i32, i32
  }
  func.func @transform_1(%arg0: i32, %arg1: i32) -> (i32, i32) {
    %c0_i32 = arith.constant 0 : i32
    %c0_i32_0 = arith.constant 0 : i32
    return %arg0, %c0_i32 : i32, i32
  }
  func.func @transform_2(%arg0: i32, %arg1: i32) -> (i32, i32) {
    %c0_i32 = arith.constant 0 : i32
    %c0_i32_0 = arith.constant 0 : i32
    return %c0_i32, %arg1 : i32, i32
  }
  func.func @transform_3(%arg0: i32, %arg1: i32) -> (i32, i32) {
    %c0_i32 = arith.constant 0 : i32
    %c0_i32_0 = arith.constant 0 : i32
    return %c0_i32, %arg1 : i32, i32
  }
  func.func @transform_4(%arg0: i32, %arg1: i32) -> (i32, i32) {
    %c0_i32 = arith.constant 0 : i32
    %c0_i32_0 = arith.constant 0 : i32
    return %arg1, %c0_i32 : i32, i32
  }
  func.func @transform_5(%arg0: i32, %arg1: i32) -> (i32, i32) {
    %c0_i32 = arith.constant 0 : i32
    %c0_i32_0 = arith.constant 0 : i32
    %c0_i32_1 = arith.constant 0 : i32
    return %c0_i32, %c0_i32_0 : i32, i32
  }
  func.func @transform_6(%arg0: i32, %arg1: i32) -> (i32, i32) {
    %c0_i32 = arith.constant 0 : i32
    %c0_i32_0 = arith.constant 0 : i32
    return %arg0, %c0_i32 : i32, i32
  }
}

module attributes {stable_mosaic.version = 11 : i64} {
  func.func @_ffn_kernel(%arg0: i32, %arg1: i32, %arg2: memref<16x128xbf16, #tpu.memory_space<vmem>>, %arg3: memref<16x1xf32, #tpu.memory_space<vmem>>, %arg4: memref<128x256xbf16, #tpu.memory_space<vmem>>, %arg5: memref<1x256xf32, #tpu.memory_space<vmem>>, %arg6: memref<256x128xbf16, #tpu.memory_space<vmem>>, %arg7: memref<1x128xf32, #tpu.memory_space<vmem>>, %arg8: memref<16x128xf32, #tpu.memory_space<vmem>>, %arg9: memref<16x128xf32, #tpu.memory_space<vmem>>) attributes {dimension_semantics = [#tpu.dimension_semantics<parallel>, #tpu.dimension_semantics<arbitrary>], iteration_bounds = array<i64: 1, 1>, scalar_prefetch = 0 : i64, scratch_operands = 1 : i64, tpu.core_type = #tpu.core_type<tc>, window_params = [{transform_indices = @transform_0, window_bounds = array<i64: 16, 128>}, {transform_indices = @transform_1, window_bounds = array<i64: 16, 1>}, {transform_indices = @transform_2, window_bounds = array<i64: 128, 256>}, {transform_indices = @transform_3, window_bounds = array<i64: 1, 256>}, {transform_indices = @transform_4, window_bounds = array<i64: 256, 128>}, {pipeline_mode = #tpu.pipeline_mode<synchronous>, transform_indices = @transform_5, window_bounds = array<i64: 1, 128>}, {transform_indices = @transform_6, window_bounds = array<i64: 16, 128>}]} {
    %c0_i32 = arith.constant 0 : i32
    %0 = arith.cmpi eq, %arg1, %c0_i32 : i32
    %1 = arith.extui %0 : i1 to i32
    %c0_i32_0 = arith.constant 0 : i32
    %2 = arith.cmpi ne, %1, %c0_i32_0 : i32
    scf.if %2 {
      %cst_16 = arith.constant 0.000000e+00 : f32
      %20 = vector.broadcast %cst_16 : f32 to vector<16x128xf32>
      %c0_17 = arith.constant 0 : index
      %c0_18 = arith.constant 0 : index
      %21 = vector.load %arg9[%c0_17, %c0_18] : memref<16x128xf32, #tpu.memory_space<vmem>>, vector<16x128xf32>
      tpu.vector_store %arg9[%c0_17, %c0_18], %20 {strides = array<i32>} : memref<16x128xf32, #tpu.memory_space<vmem>>, vector<16x128xf32>,
    } else {
    }
    %c0 = arith.constant 0 : index
    %c0_1 = arith.constant 0 : index
    %3 = vector.load %arg2[%c0, %c0_1] : memref<16x128xbf16, #tpu.memory_space<vmem>>, vector<16x128xbf16>
    %c0_2 = arith.constant 0 : index
    %c0_3 = arith.constant 0 : index
    %4 = vector.load %arg4[%c0_2, %c0_3] : memref<128x256xbf16, #tpu.memory_space<vmem>>, vector<128x256xbf16>
    %cst = arith.constant dense<0.000000e+00> : vector<16x256xf32>
    %5 = tpu.matmul %3, %4, %cst {dimension_numbers = #tpu.dot_dimension_numbers<[1], [0], [0], [1], [0, 0, 1, 1], [], []>} : vector<16x128xbf16>, vector<128x256xbf16>, vector<16x256xf32> -> vector<16x256xf32>
    %c0_4 = arith.constant 0 : index
    %c0_5 = arith.constant 0 : index
    %6 = vector.load %arg5[%c0_4, %c0_5] : memref<1x256xf32, #tpu.memory_space<vmem>>, vector<1x256xf32>
    %7 = vector.broadcast %6 : vector<1x256xf32> to vector<16x256xf32>
    %8 = arith.addf %5, %7 : vector<16x256xf32>
    %cst_6 = arith.constant 0.000000e+00 : f32
    %9 = vector.broadcast %cst_6 : f32 to vector<16x256xf32>
    %10 = arith.maximumf %8, %9 : vector<16x256xf32>
    %c0_7 = arith.constant 0 : index
    %c0_8 = arith.constant 0 : index
    %11 = vector.load %arg9[%c0_7, %c0_8] : memref<16x128xf32, #tpu.memory_space<vmem>>, vector<16x128xf32>
    %12 = arith.truncf %10 : vector<16x256xf32> to vector<16x256xbf16>
    %c0_9 = arith.constant 0 : index
    %c0_10 = arith.constant 0 : index
    %13 = vector.load %arg6[%c0_9, %c0_10] : memref<256x128xbf16, #tpu.memory_space<vmem>>, vector<256x128xbf16>
    %cst_11 = arith.constant dense<0.000000e+00> : vector<16x128xf32>
    %14 = tpu.matmul %12, %13, %cst_11 {dimension_numbers = #tpu.dot_dimension_numbers<[1], [0], [0], [1], [0, 0, 1, 1], [], []>} : vector<16x256xbf16>, vector<256x128xbf16>, vector<16x128xf32> -> vector<16x128xf32>
    %15 = arith.addf %11, %14 : vector<16x128xf32>
    %c0_12 = arith.constant 0 : index
    %c0_13 = arith.constant 0 : index
    %16 = vector.load %arg9[%c0_12, %c0_13] : memref<16x128xf32, #tpu.memory_space<vmem>>, vector<16x128xf32>
    tpu.vector_store %arg9[%c0_12, %c0_13], %15 {strides = array<i32>} : memref<16x128xf32, #tpu.memory_space<vmem>>, vector<16x128xf32>,
    %c0_i32_14 = arith.constant 0 : i32
    %17 = arith.cmpi eq, %arg1, %c0_i32_14 : i32
    %18 = arith.extui %17 : i1 to i32
    %c0_i32_15 = arith.constant 0 : i32
    %19 = arith.cmpi ne, %18, %c0_i32_15 : i32
    scf.if %19 {
      %c0_16 = arith.constant 0 : index
      %c0_17 = arith.constant 0 : index
      %20 = vector.load %arg9[%c0_16, %c0_17] : memref<16x128xf32, #tpu.memory_space<vmem>>, vector<16x128xf32>
      %c0_18 = arith.constant 0 : index
      %c0_19 = arith.constant 0 : index
      %21 = vector.load %arg7[%c0_18, %c0_19] : memref<1x128xf32, #tpu.memory_space<vmem>>, vector<1x128xf32>
      %22 = vector.broadcast %21 : vector<1x128xf32> to vector<16x128xf32>
      %23 = arith.addf %20, %22 : vector<16x128xf32>
      %cst_20 = arith.constant 0.000000e+00 : f32
      %24 = vector.broadcast %cst_20 : f32 to vector<16x128xf32>
      %25 = arith.maximumf %23, %24 : vector<16x128xf32>
      %c0_21 = arith.constant 0 : index
      %c0_22 = arith.constant 0 : index
      %26 = vector.load %arg3[%c0_21, %c0_22] : memref<16x1xf32, #tpu.memory_space<vmem>>, vector<16x1xf32>
      %27 = vector.broadcast %26 : vector<16x1xf32> to vector<16x128xf32>
      %28 = arith.mulf %25, %27 : vector<16x128xf32>
      %c0_23 = arith.constant 0 : index
      %c0_24 = arith.constant 0 : index
      %29 = vector.load %arg8[%c0_23, %c0_24] : memref<16x128xf32, #tpu.memory_space<vmem>>, vector<16x128xf32>
      tpu.vector_store %arg8[%c0_23, %c0_24], %28 {strides = array<i32>} : memref<16x128xf32, #tpu.memory_space<vmem>>, vector<16x128xf32>,
    } else {
    }
    return
  }
  func.func @transform_0(%arg0: i32, %arg1: i32) -> (i32, i32) {
    %c0_i32 = arith.constant 0 : i32
    %c0_i32_0 = arith.constant 0 : i32
    return %arg0, %c0_i32 : i32, i32
  }
  func.func @transform_1(%arg0: i32, %arg1: i32) -> (i32, i32) {
    %c0_i32 = arith.constant 0 : i32
    %c0_i32_0 = arith.constant 0 : i32
    return %arg0, %c0_i32 : i32, i32
  }
  func.func @transform_2(%arg0: i32, %arg1: i32) -> (i32, i32) {
    %c0_i32 = arith.constant 0 : i32
    %c0_i32_0 = arith.constant 0 : i32
    return %c0_i32, %arg1 : i32, i32
  }
  func.func @transform_3(%arg0: i32, %arg1: i32) -> (i32, i32) {
    %c0_i32 = arith.constant 0 : i32
    %c0_i32_0 = arith.constant 0 : i32
    return %c0_i32, %arg1 : i32, i32
  }
  func.func @transform_4(%arg0: i32, %arg1: i32) -> (i32, i32) {
    %c0_i32 = arith.constant 0 : i32
    %c0_i32_0 = arith.constant 0 : i32
    return %arg1, %c0_i32 : i32, i32
  }
  func.func @transform_5(%arg0: i32, %arg1: i32) -> (i32, i32) {
    %c0_i32 = arith.constant 0 : i32
    %c0_i32_0 = arith.constant 0 : i32
    %c0_i32_1 = arith.constant 0 : i32
    return %c0_i32, %c0_i32_0 : i32, i32
  }
  func.func @transform_6(%arg0: i32, %arg1: i32) -> (i32, i32) {
    %c0_i32 = arith.constant 0 : i32
    %c0_i32_0 = arith.constant 0 : i32
    return %arg0, %c0_i32 : i32, i32
  }
}

</mosaic_0001>

<llo_original>
// kernel: tpu_custom_call.1
$region0: #{tpu_custom_call.1}
  #allocation0 [shape = 'u32[]', space=smem, size = 0x4, offset = 0x4, fixed_abs, tag = 'smem constant byte address 0x4 - core index']
  #allocation1 [shape = 'u32[144,128]{1,0:T(1,128)}', space=vmem, size = 0x12000, scoped, tag = 'internal scratch']
  #allocation2 [shape = 'f32[16,128]{1,0:T(8,128)}', space=vmem, size = 0x2000, scoped, tag = 'scratch operand']
  %s0 = inlined_call_operand.vmem [shape: bf16[16,128], index: 0, kind: input, shape index: {}]
  %s1 = inlined_call_operand.vmem [shape: f32[16,1], index: 1, kind: input, shape index: {}]
  %s2 = inlined_call_operand.hbm [shape: bf16[128,256], index: 2, kind: input, shape index: {}]
  %s3 = inlined_call_operand.vmem [shape: f32[1,256], index: 3, kind: input, shape index: {}]
  %s4 = inlined_call_operand.hbm [shape: bf16[256,128], index: 4, kind: input, shape index: {}]
  %s5 = inlined_call_operand.vmem [shape: f32[1,128], index: 5, kind: input, shape index: {}]
  %s6 = inlined_call_operand.hbm [shape: f32[16,128], index: 6, kind: output, shape index: {}]
  %s7 = sld [smem:[#allocation0]]
  $region50: #{tpu_custom_call.1} parent=0
    _
  %s9 = ssub.s32 1, %s7
  %s10 = scalar_select 0, %s9, %s7
  $region1: #{tpu_custom_call.1} parent=0
    #allocation3 [shape = 'u8[65536]{0}', space=vmem, size = 0x10000, scoped, tag = 'input window, operand 2, single buffered']
    #allocation4 [shape = 's32[1]{0}', space=sflag, size = 0x4, scoped, tag = 'scoped memory for tpu_custom_call.1']
    #allocation5 [shape = 's32[1]{0}', space=sflag, size = 0x4, scoped, tag = 'scoped memory for tpu_custom_call.1']
    #allocation6 [shape = 'u8[65536]{0}', space=vmem, size = 0x10000, scoped, tag = 'input window, operand 4, single buffered']
    #allocation7 [shape = 's32[1]{0}', space=sflag, size = 0x4, scoped, tag = 'scoped memory for tpu_custom_call.1']
    #allocation8 [shape = 'u8[8192]{0}', space=vmem, size = 0x2000, scoped, tag = 'output window, operand 0, single buffered']
    %11 = vsyncpa [#allocation4], 0
    %12 = vsyncpa [#allocation7], 0
    %13 = vsyncpa [#allocation5], 0
    // Predicated region
    $region2: #{tpu_custom_call.1} parent=1 // pred_check
      _
    $region3: #{tpu_custom_call.1} parent=1 // pred_check_branch
      %15 = sbr.rel (0) target = $region5
    $region4: #{tpu_custom_call.1} parent=1 // pred_region
      _
    $region5: #{tpu_custom_call.1} parent=1 // pred_fallthru
      _
    // Predicated region
    $region6: #{tpu_custom_call.1} parent=1 // pred_check
      _
    $region7: #{tpu_custom_call.1} parent=1 // pred_check_branch
      %17 = sbr.rel (0) target = $region9
    $region8: #{tpu_custom_call.1} parent=1 // pred_region
      _
    $region9: #{tpu_custom_call.1} parent=1 // pred_fallthru
      _
    // Predicated region
    $region10: #{tpu_custom_call.1} parent=1 // pred_check
      _
    $region11: #{tpu_custom_call.1} parent=1 // pred_check_branch
      %19 = sbr.rel (0) target = $region13
    $region12: #{tpu_custom_call.1} parent=1 // pred_region
      %s21 = ssub.s32 2048, 2048
      %22 = vsyncadd [#allocation4], %s21
      %s23 = sshll.u32 [#allocation3], 4
      %s24 = int_to_ptr.vmem [resolvable:$true] %s23
      %29 = dma.hbm_to_vmem [thread:$0]  %s2, 2048, %s24, [#allocation4], 128, 128, 8
    $region13: #{tpu_custom_call.1} parent=1 // pred_fallthru
      _
    // Predicated region
    $region14: #{tpu_custom_call.1} parent=1 // pred_check
      _
    $region15: #{tpu_custom_call.1} parent=1 // pred_check_branch
      %31 = sbr.rel (0) target = $region17
    $region16: #{tpu_custom_call.1} parent=1 // pred_region
      _
    $region17: #{tpu_custom_call.1} parent=1 // pred_fallthru
      _
    // Predicated region
    $region18: #{tpu_custom_call.1} parent=1 // pred_check
      _
    $region19: #{tpu_custom_call.1} parent=1 // pred_check_branch
      %33 = sbr.rel (0) target = $region21
    $region20: #{tpu_custom_call.1} parent=1 // pred_region
      %s35 = ssub.s32 2048, 2048
      %36 = vsyncadd [#allocation7], %s35
      %s37 = sshll.u32 [#allocation6], 4
      %s38 = int_to_ptr.vmem [resolvable:$true] %s37
      %43 = dma.hbm_to_vmem [thread:$0]  %s4, 2048, %s38, [#allocation7], 64, 64, 4
    $region21: #{tpu_custom_call.1} parent=1 // pred_fallthru
      _
    // Predicated region
    $region22: #{tpu_custom_call.1} parent=1 // pred_check
      _
    $region23: #{tpu_custom_call.1} parent=1 // pred_check_branch
      %45 = sbr.rel (0) target = $region25
    $region24: #{tpu_custom_call.1} parent=1 // pred_region
      _
    $region25: #{tpu_custom_call.1} parent=1 // pred_fallthru
      _
    // Predicated region
    $region26: #{tpu_custom_call.1} parent=1 // pred_check
      _
    $region27: #{tpu_custom_call.1} parent=1 // pred_check_branch
      %47 = sbr.rel (0) target = $region29
    $region28: #{tpu_custom_call.1} parent=1 // pred_region
      %48 = dma.done [#allocation4], 2048
    $region29: #{tpu_custom_call.1} parent=1 // pred_fallthru
      _
    // Predicated region
    $region30: #{tpu_custom_call.1} parent=1 // pred_check
      _
    $region31: #{tpu_custom_call.1} parent=1 // pred_check_branch
      %50 = sbr.rel (0) target = $region33
    $region32: #{tpu_custom_call.1} parent=1 // pred_region
      %51 = dma.done [#allocation7], 2048
    $region33: #{tpu_custom_call.1} parent=1 // pred_fallthru
      _
    %p53 = scmp.eq.s32.totalorder 0, 0
    // Predicated region
    $region34: #{tpu_custom_call.1} parent=1 // pred_check
      %p54 = pneg %p53
    $region35: #{tpu_custom_call.1} parent=1 // pred_check_branch
      %56 = sbr.rel (%p54) target = $region37
    $region36: #{tpu_custom_call.1} parent=1 // pred_region
      %57 = vst [vmem:[#allocation2] sm:$0xff] 0.0
      %58 = vst [vmem:[#allocation2 + $0x8] sm:$0xff] 0.0
    $region37: #{tpu_custom_call.1} parent=1 // pred_fallthru
      _
    %v59 = vld [vmem:[%s0] sm:$0xf]
    %v60 = vld [vmem:[%s0 + $0x4] sm:$0xf]
    %v61 = vld [vmem:[#allocation3] sm:$0xff]
    %v62 = vld [vmem:[#allocation3 + $0x8] sm:$0xff]
    %v63 = vld [vmem:[#allocation3 + $0x10] sm:$0xff]
    %v64 = vld [vmem:[#allocation3 + $0x18] sm:$0xff]
    %v65 = vld [vmem:[#allocation3 + $0x20] sm:$0xff]
    %v66 = vld [vmem:[#allocation3 + $0x28] sm:$0xff]
    %v67 = vld [vmem:[#allocation3 + $0x30] sm:$0xff]
    %v68 = vld [vmem:[#allocation3 + $0x38] sm:$0xff]
    %v69 = vld [vmem:[#allocation3 + $0x40] sm:$0xff]
    %v70 = vld [vmem:[#allocation3 + $0x48] sm:$0xff]
    %v71 = vld [vmem:[#allocation3 + $0x50] sm:$0xff]
    %v72 = vld [vmem:[#allocation3 + $0x58] sm:$0xff]
    %v73 = vld [vmem:[#allocation3 + $0x60] sm:$0xff]
    %v74 = vld [vmem:[#allocation3 + $0x68] sm:$0xff]
    %v75 = vld [vmem:[#allocation3 + $0x70] sm:$0xff]
    %v76 = vld [vmem:[#allocation3 + $0x78] sm:$0xff]
    %v77 = vld [vmem:[%s3] sm:$0x3]
    %v79 = vlaneseq
    %v80 = vshrl.u32 %v79, 7
    %v81 = vsub.s32 0, %v80
    %v82 = vrot.slane %v77, %v81
    %v83 = vlaneseq
    %v84 = vshrl.u32 %v83, 7
    %v85 = vsub.s32 1, %v84
    %v86 = vrot.slane %v77, %v85
    %v91 = vunpack.c.l.b16 %v59
    %v92 = vunpack.c.l.b16 %v60
    %v93 = vpack.c.b16 %v92, %v91
    %v111 = vunpack.c.l.b16 %v61
    %v112 = vunpack.c.h.b16 %v61
    %v113 = vunpack.c.l.b16 %v62
    %v114 = vunpack.c.h.b16 %v62
    %v115 = vunpack.c.l.b16 %v63
    %v116 = vunpack.c.h.b16 %v63
    %v117 = vunpack.c.l.b16 %v64
    %v118 = vunpack.c.h.b16 %v64
    %v119 = vunpack.c.l.b16 %v65
    %v120 = vunpack.c.h.b16 %v65
    %v121 = vunpack.c.l.b16 %v66
    %v122 = vunpack.c.h.b16 %v66
    %v123 = vunpack.c.l.b16 %v67
    %v124 = vunpack.c.h.b16 %v67
    %v125 = vunpack.c.l.b16 %v68
    %v126 = vunpack.c.h.b16 %v68
    %v127 = vunpack.c.l.b16 %v69
    %v128 = vunpack.c.h.b16 %v69
    %v129 = vunpack.c.l.b16 %v70
    %v130 = vunpack.c.h.b16 %v70
    %v131 = vunpack.c.l.b16 %v71
    %v132 = vunpack.c.h.b16 %v71
    %v133 = vunpack.c.l.b16 %v72
    %v134 = vunpack.c.h.b16 %v72
    %v135 = vunpack.c.l.b16 %v73
    %v136 = vunpack.c.h.b16 %v73
    %v137 = vunpack.c.l.b16 %v74
    %v138 = vunpack.c.h.b16 %v74
    %v139 = vunpack.c.l.b16 %v75
    %v140 = vunpack.c.h.b16 %v75
    %v141 = vunpack.c.l.b16 %v76
    %v142 = vunpack.c.h.b16 %v76
    %v143 = vpack.c.b16 %v113, %v111
    %v144 = vpack.c.b16 %v114, %v112
    %v145 = vpack.c.b16 %v117, %v115
    %v146 = vpack.c.b16 %v118, %v116
    %v147 = vpack.c.b16 %v121, %v119
    %v148 = vpack.c.b16 %v122, %v120
    %v149 = vpack.c.b16 %v125, %v123
    %v150 = vpack.c.b16 %v126, %v124
    %v151 = vpack.c.b16 %v129, %v127
    %v152 = vpack.c.b16 %v130, %v128
    %v153 = vpack.c.b16 %v133, %v131
    %v154 = vpack.c.b16 %v134, %v132
    %v155 = vpack.c.b16 %v137, %v135
    %v156 = vpack.c.b16 %v138, %v136
    %v157 = vpack.c.b16 %v141, %v139
    %v158 = vpack.c.b16 %v142, %v140
    %175 = vmatprep.subr.bf16.mxu0 %v144
    %176 = vmatpush1.bf16.msra.mxu0 %v143
    %177 = vmatprep.subr.bf16.mxu0 %v146
    %178 = vmatpush1.bf16.msra.mxu0 %v145
    %179 = vmatprep.subr.bf16.mxu0 %v148
    %180 = vmatpush1.bf16.msra.mxu0 %v147
    %181 = vmatprep.subr.bf16.mxu0 %v150
    %182 = vmatpush1.bf16.msra.mxu0 %v149
    %183 = vmatprep.subr.bf16.mxu0 %v152
    %184 = vmatpush1.bf16.msra.mxu0 %v151
    %185 = vmatprep.subr.bf16.mxu0 %v154
    %186 = vmatpush1.bf16.msra.mxu0 %v153
    %187 = vmatprep.subr.bf16.mxu0 %v156
    %188 = vmatpush1.bf16.msra.mxu0 %v155
    %189 = vmatprep.subr.bf16.mxu0 %v158
    %190 = vmatpush1.bf16.msra.mxu0 %v157
    %191 = vmatprep.subr.bf16.mxu0 0
    %192 = vmatpush1.bf16.msra.mxu0 0
    %193 = vmatprep.subr.bf16.mxu0 0
    %194 = vmatpush1.bf16.msra.mxu0 0
    %195 = vmatprep.subr.bf16.mxu0 0
    %196 = vmatpush1.bf16.msra.mxu0 0
    %197 = vmatprep.subr.bf16.mxu0 0
    %198 = vmatpush1.bf16.msra.mxu0 0
    %199 = vmatprep.subr.bf16.mxu0 0
    %200 = vmatpush1.bf16.msra.mxu0 0
    %201 = vmatprep.subr.bf16.mxu0 0
    %202 = vmatpush1.bf16.msra.mxu0 0
    %203 = vmatprep.subr.bf16.mxu0 0
    %204 = vmatpush1.bf16.msra.mxu0 0
    %205 = vmatprep.subr.bf16.mxu0 0
    %206 = vmatpush1.bf16.msra.mxu0 0
    %207 = vmatprep.mubr.bf16.mxu0 0
    %208 = vmatmul.mubr.bf16.gmra.mrb[0].mxu0 %v93
    %v209 = vpop.f32.mrb[0].mxu0
    %v210 = vadd.f32 %v82, %v209
    %v211 = vpop.f32.mrb[0].mxu0
    %v212 = vadd.f32 %v86, %v211
    %v213 = vpop.f32.mrb[0].mxu0
    %v214 = vadd.f32 %v82, %v213
    %v215 = vpop.f32.mrb[0].mxu0
    %v216 = vadd.f32 %v86, %v215
    %217 = vdwg.mxu0
    %v218 = vmax.f32 %v210, 0.0
    %v219 = vmax.f32 %v212, 0.0
    %v220 = vmax.f32 %v214, 0.0
    %v221 = vmax.f32 %v216, 0.0
    %v222 = vld [vmem:[#allocation2] sm:$0xff]
    %v223 = vld [vmem:[#allocation2 + $0x8] sm:$0xff]
    %v224 = vpack.c.bf16 %v220, %v218
    %v225 = vpack.c.bf16 %v221, %v219
    %v226 = vld [vmem:[#allocation6] sm:$0xf]
    %v227 = vld [vmem:[#allocation6 + $0x4] sm:$0xf]
    %v228 = vld [vmem:[#allocation6 + $0x8] sm:$0xf]
    %v229 = vld [vmem:[#allocation6 + $0xc] sm:$0xf]
    %v230 = vld [vmem:[#allocation6 + $0x10] sm:$0xf]
    %v231 = vld [vmem:[#allocation6 + $0x14] sm:$0xf]
    %v232 = vld [vmem:[#allocation6 + $0x18] sm:$0xf]
    %v233 = vld [vmem:[#allocation6 + $0x1c] sm:$0xf]
    %v234 = vld [vmem:[#allocation6 + $0x20] sm:$0xf]
    %v235 = vld [vmem:[#allocation6 + $0x24] sm:$0xf]
    %v236 = vld [vmem:[#allocation6 + $0x28] sm:$0xf]
    %v237 = vld [vmem:[#allocation6 + $0x2c] sm:$0xf]
    %v238 = vld [vmem:[#allocation6 + $0x30] sm:$0xf]
    %v239 = vld [vmem:[#allocation6 + $0x34] sm:$0xf]
    %v240 = vld [vmem:[#allocation6 + $0x38] sm:$0xf]
    %v241 = vld [vmem:[#allocation6 + $0x3c] sm:$0xf]
    %v242 = vld [vmem:[#allocation6 + $0x40] sm:$0xf]
    %v243 = vld [vmem:[#allocation6 + $0x44] sm:$0xf]
    %v244 = vld [vmem:[#allocation6 + $0x48] sm:$0xf]
    %v245 = vld [vmem:[#allocation6 + $0x4c] sm:$0xf]
    %v246 = vld [vmem:[#allocation6 + $0x50] sm:$0xf]
    %v247 = vld [vmem:[#allocation6 + $0x54] sm:$0xf]
    %v248 = vld [vmem:[#allocation6 + $0x58] sm:$0xf]
    %v249 = vld [vmem:[#allocation6 + $0x5c] sm:$0xf]
    %v250 = vld [vmem:[#allocation6 + $0x60] sm:$0xf]
    %v251 = vld [vmem:[#allocation6 + $0x64] sm:$0xf]
    %v252 = vld [vmem:[#allocation6 + $0x68] sm:$0xf]
    %v253 = vld [vmem:[#allocation6 + $0x6c] sm:$0xf]
    %v254 = vld [vmem:[#allocation6 + $0x70] sm:$0xf]
    %v255 = vld [vmem:[#allocation6 + $0x74] sm:$0xf]
    %v256 = vld [vmem:[#allocation6 + $0x78] sm:$0xf]
    %v257 = vld [vmem:[#allocation6 + $0x7c] sm:$0xf]
    %v290 = vunpack.c.l.b16 %v226
    %v291 = vunpack.c.l.b16 %v227
    %v292 = vunpack.c.l.b16 %v228
    %v293 = vunpack.c.l.b16 %v229
    %v294 = vunpack.c.l.b16 %v230
    %v295 = vunpack.c.l.b16 %v231
    %v296 = vunpack.c.l.b16 %v232
    %v297 = vunpack.c.l.b16 %v233
    %v298 = vunpack.c.l.b16 %v234
    %v299 = vunpack.c.l.b16 %v235
    %v300 = vunpack.c.l.b16 %v236
    %v301 = vunpack.c.l.b16 %v237
    %v302 = vunpack.c.l.b16 %v238
    %v303 = vunpack.c.l.b16 %v239
    %v304 = vunpack.c.l.b16 %v240
    %v305 = vunpack.c.l.b16 %v241
    %v306 = vunpack.c.l.b16 %v242
    %v307 = vunpack.c.l.b16 %v243
    %v308 = vunpack.c.l.b16 %v244
    %v309 = vunpack.c.l.b16 %v245
    %v310 = vunpack.c.l.b16 %v246
    %v311 = vunpack.c.l.b16 %v247
    %v312 = vunpack.c.l.b16 %v248
    %v313 = vunpack.c.l.b16 %v249
    %v314 = vunpack.c.l.b16 %v250
    %v315 = vunpack.c.l.b16 %v251
    %v316 = vunpack.c.l.b16 %v252
    %v317 = vunpack.c.l.b16 %v253
    %v318 = vunpack.c.l.b16 %v254
    %v319 = vunpack.c.l.b16 %v255
    %v320 = vunpack.c.l.b16 %v256
    %v321 = vunpack.c.l.b16 %v257
    %v322 = vpack.c.b16 %v291, %v290
    %v323 = vpack.c.b16 %v293, %v292
    %v324 = vpack.c.b16 %v295, %v294
    %v325 = vpack.c.b16 %v297, %v296
    %v326 = vpack.c.b16 %v299, %v298
    %v327 = vpack.c.b16 %v301, %v300
    %v328 = vpack.c.b16 %v303, %v302
    %v329 = vpack.c.b16 %v305, %v304
    %v330 = vpack.c.b16 %v307, %v306
    %v331 = vpack.c.b16 %v309, %v308
    %v332 = vpack.c.b16 %v311, %v310
    %v333 = vpack.c.b16 %v313, %v312
    %v334 = vpack.c.b16 %v315, %v314
    %v335 = vpack.c.b16 %v317, %v316
    %v336 = vpack.c.b16 %v319, %v318
    %v337 = vpack.c.b16 %v321, %v320
    %354 = vmatprep.subr.bf16.mxu0 0
    %355 = vmatpush1.bf16.msra.mxu0 %v322
    %356 = vmatprep.subr.bf16.mxu0 0
    %357 = vmatpush1.bf16.msra.mxu0 %v323
    %358 = vmatprep.subr.bf16.mxu0 0
    %359 = vmatpush1.bf16.msra.mxu0 %v324
    %360 = vmatprep.subr.bf16.mxu0 0
    %361 = vmatpush1.bf16.msra.mxu0 %v325
    %362 = vmatprep.subr.bf16.mxu0 0
    %363 = vmatpush1.bf16.msra.mxu0 %v326
    %364 = vmatprep.subr.bf16.mxu0 0
    %365 = vmatpush1.bf16.msra.mxu0 %v327
    %366 = vmatprep.subr.bf16.mxu0 0
    %367 = vmatpush1.bf16.msra.mxu0 %v328
    %368 = vmatprep.subr.bf16.mxu0 0
    %369 = vmatpush1.bf16.msra.mxu0 %v329
    %370 = vmatprep.subr.bf16.mxu0 0
    %371 = vmatpush1.bf16.msra.mxu0 %v330
    %372 = vmatprep.subr.bf16.mxu0 0
    %373 = vmatpush1.bf16.msra.mxu0 %v331
    %374 = vmatprep.subr.bf16.mxu0 0
    %375 = vmatpush1.bf16.msra.mxu0 %v332
    %376 = vmatprep.subr.bf16.mxu0 0
    %377 = vmatpush1.bf16.msra.mxu0 %v333
    %378 = vmatprep.subr.bf16.mxu0 0
    %379 = vmatpush1.bf16.msra.mxu0 %v334
    %380 = vmatprep.subr.bf16.mxu0 0
    %381 = vmatpush1.bf16.msra.mxu0 %v335
    %382 = vmatprep.subr.bf16.mxu0 0
    %383 = vmatpush1.bf16.msra.mxu0 %v336
    %384 = vmatprep.subr.bf16.mxu0 0
    %385 = vmatpush1.bf16.msra.mxu0 %v337
    %386 = vmatprep.mubr.bf16.mxu0 %v225
    %387 = vmatmul.mubr.bf16.gmra.mrb[0].mxu0 %v224
    %v388 = vpop.f32.mrb[0].mxu0
    %v389 = vadd.f32 0.0, %v388
    %v390 = vpop.f32.mrb[0].mxu0
    %v391 = vpop.f32.mrb[0].mxu0
    %v392 = vadd.f32 0.0, %v391
    %v393 = vpop.f32.mrb[0].mxu0
    %394 = vdwg.mxu0
    %v395 = vadd.f32 %v222, %v389
    %v396 = vadd.f32 %v223, %v392
    %397 = vst [vmem:[#allocation2] sm:$0xff] %v395
    %398 = vst [vmem:[#allocation2 + $0x8] sm:$0xff] %v396
    // Predicated region
    $region38: #{tpu_custom_call.1} parent=1 // pred_check
      %p399 = pneg %p53
    $region39: #{tpu_custom_call.1} parent=1 // pred_check_branch
      %401 = sbr.rel (%p399) target = $region41
    $region40: #{tpu_custom_call.1} parent=1 // pred_region
      %v402 = vld [vmem:[#allocation2] sm:$0xff]
      %v403 = vld [vmem:[#allocation2 + $0x8] sm:$0xff]
      %v404 = vld [vmem:[%s5] sm:$0x1]
      %v406 = vlaneseq
      %v407 = vshrl.u32 %v406, 7
      %v408 = vsub.s32 0, %v407
      %v409 = vrot.slane %v404, %v408
      %v411 = vadd.f32 %v402, %v409
      %v412 = vadd.f32 %v403, %v409
      %v413 = vmax.f32 %v411, 0.0
      %v414 = vmax.f32 %v412, 0.0
      %v415 = vld [vmem:[%s1] sm:$0xff]
      %v416 = vld [vmem:[%s1 + $0x8] sm:$0xff]
      %418 = vset.pattern.permute.xlu0 0
      %419 = vperm.xlu0 %418, %v415
      %v420 = vpop.permute.xlu0 %419
      %423 = vset.pattern.permute.xlu0 0
      %424 = vperm.xlu0 %423, %v416
      %v425 = vpop.permute.xlu0 %424
      %v427 = vmul.f32 %v413, %v420
      %v428 = vmul.f32 %v414, %v425
      %429 = vst [vmem:[#allocation8] sm:$0xff] %v427
      %430 = vst [vmem:[#allocation8 + $0x8] sm:$0xff] %v428
    $region41: #{tpu_custom_call.1} parent=1 // pred_fallthru
      _
    // Predicated region
    $region42: #{tpu_custom_call.1} parent=1 // pred_check
      _
    $region43: #{tpu_custom_call.1} parent=1 // pred_check_branch
      %432 = sbr.rel (0) target = $region45
    $region44: #{tpu_custom_call.1} parent=1 // pred_region
      %s434 = ssub.s32 256, 256
      %435 = vsyncadd [#allocation5], %s434
      %s436 = sshll.u32 [#allocation8], 4
      %s437 = int_to_ptr.vmem [resolvable:$true] %s436
      %442 = dma.vmem_to_hbm [thread:$0]  %s437, 256, %s6, [#allocation5], 128, 128, 8
    $region45: #{tpu_custom_call.1} parent=1 // pred_fallthru
      _
    // Predicated region
    $region46: #{tpu_custom_call.1} parent=1 // pred_check
      _
    $region47: #{tpu_custom_call.1} parent=1 // pred_check_branch
      %444 = sbr.rel (0) target = $region49
    $region48: #{tpu_custom_call.1} parent=1 // pred_region
      %445 = dma.done [#allocation5], 256
    $region49: #{tpu_custom_call.1} parent=1 // pred_fallthru
      _
    %446 = vsyncpa [#allocation4], 1
    %447 = vsyncpa [#allocation7], 1
    %448 = vsyncpa [#allocation5], 1

// kernel: tpu_custom_call.1
$region0: #{tpu_custom_call.1}
  #allocation0 [shape = 'u32[]', space=smem, size = 0x4, offset = 0x4, fixed_abs, tag = 'smem constant byte address 0x4 - core index']
  #allocation1 [shape = 'u32[144,128]{1,0:T(1,128)}', space=vmem, size = 0x12000, scoped, tag = 'internal scratch']
  #allocation2 [shape = 'f32[16,128]{1,0:T(8,128)}', space=vmem, size = 0x2000, scoped, tag = 'scratch operand']
  %s0 = inlined_call_operand.vmem [shape: bf16[16,128], index: 0, kind: input, shape index: {}]
  %s1 = inlined_call_operand.vmem [shape: f32[16,1], index: 1, kind: input, shape index: {}]
  %s2 = inlined_call_operand.hbm [shape: bf16[128,256], index: 2, kind: input, shape index: {}]
  %s3 = inlined_call_operand.vmem [shape: f32[1,256], index: 3, kind: input, shape index: {}]
  %s4 = inlined_call_operand.hbm [shape: bf16[256,128], index: 4, kind: input, shape index: {}]
  %s5 = inlined_call_operand.vmem [shape: f32[1,128], index: 5, kind: input, shape index: {}]
  %s6 = inlined_call_operand.hbm [shape: f32[16,128], index: 6, kind: output, shape index: {}]
  %s7 = sld [smem:[#allocation0]]
  $region50: #{tpu_custom_call.1} parent=0
    _
  %s9 = ssub.s32 1, %s7
  %s10 = scalar_select 0, %s9, %s7
  $region1: #{tpu_custom_call.1} parent=0
    #allocation3 [shape = 'u8[65536]{0}', space=vmem, size = 0x10000, scoped, tag = 'input window, operand 2, single buffered']
    #allocation4 [shape = 's32[1]{0}', space=sflag, size = 0x4, scoped, tag = 'scoped memory for tpu_custom_call.1']
    #allocation5 [shape = 's32[1]{0}', space=sflag, size = 0x4, scoped, tag = 'scoped memory for tpu_custom_call.1']
    #allocation6 [shape = 'u8[65536]{0}', space=vmem, size = 0x10000, scoped, tag = 'input window, operand 4, single buffered']
    #allocation7 [shape = 's32[1]{0}', space=sflag, size = 0x4, scoped, tag = 'scoped memory for tpu_custom_call.1']
    #allocation8 [shape = 'u8[8192]{0}', space=vmem, size = 0x2000, scoped, tag = 'output window, operand 0, single buffered']
    %11 = vsyncpa [#allocation4], 0
    %12 = vsyncpa [#allocation7], 0
    %13 = vsyncpa [#allocation5], 0
    // Predicated region
    $region2: #{tpu_custom_call.1} parent=1 // pred_check
      _
    $region3: #{tpu_custom_call.1} parent=1 // pred_check_branch
      %15 = sbr.rel (0) target = $region5
    $region4: #{tpu_custom_call.1} parent=1 // pred_region
      _
    $region5: #{tpu_custom_call.1} parent=1 // pred_fallthru
      _
    // Predicated region
    $region6: #{tpu_custom_call.1} parent=1 // pred_check
      _
    $region7: #{tpu_custom_call.1} parent=1 // pred_check_branch
      %17 = sbr.rel (0) target = $region9
    $region8: #{tpu_custom_call.1} parent=1 // pred_region
      _
    $region9: #{tpu_custom_call.1} parent=1 // pred_fallthru
      _
    // Predicated region
    $region10: #{tpu_custom_call.1} parent=1 // pred_check
      _
    $region11: #{tpu_custom_call.1} parent=1 // pred_check_branch
      %19 = sbr.rel (0) target = $region13
    $region12: #{tpu_custom_call.1} parent=1 // pred_region
      %s21 = ssub.s32 2048, 2048
      %22 = vsyncadd [#allocation4], %s21
      %s23 = sshll.u32 [#allocation3], 4
      %s24 = int_to_ptr.vmem [resolvable:$true] %s23
      %29 = dma.hbm_to_vmem [thread:$0]  %s2, 2048, %s24, [#allocation4], 128, 128, 8
    $region13: #{tpu_custom_call.1} parent=1 // pred_fallthru
      _
    // Predicated region
    $region14: #{tpu_custom_call.1} parent=1 // pred_check
      _
    $region15: #{tpu_custom_call.1} parent=1 // pred_check_branch
      %31 = sbr.rel (0) target = $region17
    $region16: #{tpu_custom_call.1} parent=1 // pred_region
      _
    $region17: #{tpu_custom_call.1} parent=1 // pred_fallthru
      _
    // Predicated region
    $region18: #{tpu_custom_call.1} parent=1 // pred_check
      _
    $region19: #{tpu_custom_call.1} parent=1 // pred_check_branch
      %33 = sbr.rel (0) target = $region21
    $region20: #{tpu_custom_call.1} parent=1 // pred_region
      %s35 = ssub.s32 2048, 2048
      %36 = vsyncadd [#allocation7], %s35
      %s37 = sshll.u32 [#allocation6], 4
      %s38 = int_to_ptr.vmem [resolvable:$true] %s37
      %43 = dma.hbm_to_vmem [thread:$0]  %s4, 2048, %s38, [#allocation7], 64, 64, 4
    $region21: #{tpu_custom_call.1} parent=1 // pred_fallthru
      _
    // Predicated region
    $region22: #{tpu_custom_call.1} parent=1 // pred_check
      _
    $region23: #{tpu_custom_call.1} parent=1 // pred_check_branch
      %45 = sbr.rel (0) target = $region25
    $region24: #{tpu_custom_call.1} parent=1 // pred_region
      _
    $region25: #{tpu_custom_call.1} parent=1 // pred_fallthru
      _
    // Predicated region
    $region26: #{tpu_custom_call.1} parent=1 // pred_check
      _
    $region27: #{tpu_custom_call.1} parent=1 // pred_check_branch
      %47 = sbr.rel (0) target = $region29
    $region28: #{tpu_custom_call.1} parent=1 // pred_region
      %48 = dma.done [#allocation4], 2048
    $region29: #{tpu_custom_call.1} parent=1 // pred_fallthru
      _
    // Predicated region
    $region30: #{tpu_custom_call.1} parent=1 // pred_check
      _
    $region31: #{tpu_custom_call.1} parent=1 // pred_check_branch
      %50 = sbr.rel (0) target = $region33
    $region32: #{tpu_custom_call.1} parent=1 // pred_region
      %51 = dma.done [#allocation7], 2048
    $region33: #{tpu_custom_call.1} parent=1 // pred_fallthru
      _
    %p53 = scmp.eq.s32.totalorder 0, 0
    // Predicated region
    $region34: #{tpu_custom_call.1} parent=1 // pred_check
      %p54 = pneg %p53
    $region35: #{tpu_custom_call.1} parent=1 // pred_check_branch
      %56 = sbr.rel (%p54) target = $region37
    $region36: #{tpu_custom_call.1} parent=1 // pred_region
      %57 = vst [vmem:[#allocation2] sm:$0xff] 0.0
      %58 = vst [vmem:[#allocation2 + $0x8] sm:$0xff] 0.0
    $region37: #{tpu_custom_call.1} parent=1 // pred_fallthru
      _
    %v59 = vld [vmem:[%s0] sm:$0xf]
    %v60 = vld [vmem:[%s0 + $0x4] sm:$0xf]
    %v61 = vld [vmem:[#allocation3] sm:$0xff]
    %v62 = vld [vmem:[#allocation3 + $0x8] sm:$0xff]
    %v63 = vld [vmem:[#allocation3 + $0x10] sm:$0xff]
    %v64 = vld [vmem:[#allocation3 + $0x18] sm:$0xff]
    %v65 = vld [vmem:[#allocation3 + $0x20] sm:$0xff]
    %v66 = vld [vmem:[#allocation3 + $0x28] sm:$0xff]
    %v67 = vld [vmem:[#allocation3 + $0x30] sm:$0xff]
    %v68 = vld [vmem:[#allocation3 + $0x38] sm:$0xff]
    %v69 = vld [vmem:[#allocation3 + $0x40] sm:$0xff]
    %v70 = vld [vmem:[#allocation3 + $0x48] sm:$0xff]
    %v71 = vld [vmem:[#allocation3 + $0x50] sm:$0xff]
    %v72 = vld [vmem:[#allocation3 + $0x58] sm:$0xff]
    %v73 = vld [vmem:[#allocation3 + $0x60] sm:$0xff]
    %v74 = vld [vmem:[#allocation3 + $0x68] sm:$0xff]
    %v75 = vld [vmem:[#allocation3 + $0x70] sm:$0xff]
    %v76 = vld [vmem:[#allocation3 + $0x78] sm:$0xff]
    %v77 = vld [vmem:[%s3] sm:$0x3]
    %v79 = vlaneseq
    %v80 = vshrl.u32 %v79, 7
    %v81 = vsub.s32 0, %v80
    %v82 = vrot.slane %v77, %v81
    %v83 = vlaneseq
    %v84 = vshrl.u32 %v83, 7
    %v85 = vsub.s32 1, %v84
    %v86 = vrot.slane %v77, %v85
    %v91 = vunpack.c.l.b16 %v59
    %v92 = vunpack.c.l.b16 %v60
    %v93 = vpack.c.b16 %v92, %v91
    %v111 = vunpack.c.l.b16 %v61
    %v112 = vunpack.c.h.b16 %v61
    %v113 = vunpack.c.l.b16 %v62
    %v114 = vunpack.c.h.b16 %v62
    %v115 = vunpack.c.l.b16 %v63
    %v116 = vunpack.c.h.b16 %v63
    %v117 = vunpack.c.l.b16 %v64
    %v118 = vunpack.c.h.b16 %v64
    %v119 = vunpack.c.l.b16 %v65
    %v120 = vunpack.c.h.b16 %v65
    %v121 = vunpack.c.l.b16 %v66
    %v122 = vunpack.c.h.b16 %v66
    %v123 = vunpack.c.l.b16 %v67
    %v124 = vunpack.c.h.b16 %v67
    %v125 = vunpack.c.l.b16 %v68
    %v126 = vunpack.c.h.b16 %v68
    %v127 = vunpack.c.l.b16 %v69
    %v128 = vunpack.c.h.b16 %v69
    %v129 = vunpack.c.l.b16 %v70
    %v130 = vunpack.c.h.b16 %v70
    %v131 = vunpack.c.l.b16 %v71
    %v132 = vunpack.c.h.b16 %v71
    %v133 = vunpack.c.l.b16 %v72
    %v134 = vunpack.c.h.b16 %v72
    %v135 = vunpack.c.l.b16 %v73
    %v136 = vunpack.c.h.b16 %v73
    %v137 = vunpack.c.l.b16 %v74
    %v138 = vunpack.c.h.b16 %v74
    %v139 = vunpack.c.l.b16 %v75
    %v140 = vunpack.c.h.b16 %v75
    %v141 = vunpack.c.l.b16 %v76
    %v142 = vunpack.c.h.b16 %v76
    %v143 = vpack.c.b16 %v113, %v111
    %v144 = vpack.c.b16 %v114, %v112
    %v145 = vpack.c.b16 %v117, %v115
    %v146 = vpack.c.b16 %v118, %v116
    %v147 = vpack.c.b16 %v121, %v119
    %v148 = vpack.c.b16 %v122, %v120
    %v149 = vpack.c.b16 %v125, %v123
    %v150 = vpack.c.b16 %v126, %v124
    %v151 = vpack.c.b16 %v129, %v127
    %v152 = vpack.c.b16 %v130, %v128
    %v153 = vpack.c.b16 %v133, %v131
    %v154 = vpack.c.b16 %v134, %v132
    %v155 = vpack.c.b16 %v137, %v135
    %v156 = vpack.c.b16 %v138, %v136
    %v157 = vpack.c.b16 %v141, %v139
    %v158 = vpack.c.b16 %v142, %v140
    %175 = vmatprep.subr.bf16.mxu0 %v144
    %176 = vmatpush1.bf16.msra.mxu0 %v143
    %177 = vmatprep.subr.bf16.mxu0 %v146
    %178 = vmatpush1.bf16.msra.mxu0 %v145
    %179 = vmatprep.subr.bf16.mxu0 %v148
    %180 = vmatpush1.bf16.msra.mxu0 %v147
    %181 = vmatprep.subr.bf16.mxu0 %v150
    %182 = vmatpush1.bf16.msra.mxu0 %v149
    %183 = vmatprep.subr.bf16.mxu0 %v152
    %184 = vmatpush1.bf16.msra.mxu0 %v151
    %185 = vmatprep.subr.bf16.mxu0 %v154
    %186 = vmatpush1.bf16.msra.mxu0 %v153
    %187 = vmatprep.subr.bf16.mxu0 %v156
    %188 = vmatpush1.bf16.msra.mxu0 %v155
    %189 = vmatprep.subr.bf16.mxu0 %v158
    %190 = vmatpush1.bf16.msra.mxu0 %v157
    %191 = vmatprep.subr.bf16.mxu0 0
    %192 = vmatpush1.bf16.msra.mxu0 0
    %193 = vmatprep.subr.bf16.mxu0 0
    %194 = vmatpush1.bf16.msra.mxu0 0
    %195 = vmatprep.subr.bf16.mxu0 0
    %196 = vmatpush1.bf16.msra.mxu0 0
    %197 = vmatprep.subr.bf16.mxu0 0
    %198 = vmatpush1.bf16.msra.mxu0 0
    %199 = vmatprep.subr.bf16.mxu0 0
    %200 = vmatpush1.bf16.msra.mxu0 0
    %201 = vmatprep.subr.bf16.mxu0 0
    %202 = vmatpush1.bf16.msra.mxu0 0
    %203 = vmatprep.subr.bf16.mxu0 0
    %204 = vmatpush1.bf16.msra.mxu0 0
    %205 = vmatprep.subr.bf16.mxu0 0
    %206 = vmatpush1.bf16.msra.mxu0 0
    %207 = vmatprep.mubr.bf16.mxu0 0
    %208 = vmatmul.mubr.bf16.gmra.mrb[0].mxu0 %v93
    %v209 = vpop.f32.mrb[0].mxu0
    %v210 = vadd.f32 %v82, %v209
    %v211 = vpop.f32.mrb[0].mxu0
    %v212 = vadd.f32 %v86, %v211
    %v213 = vpop.f32.mrb[0].mxu0
    %v214 = vadd.f32 %v82, %v213
    %v215 = vpop.f32.mrb[0].mxu0
    %v216 = vadd.f32 %v86, %v215
    %217 = vdwg.mxu0
    %v218 = vmax.f32 %v210, 0.0
    %v219 = vmax.f32 %v212, 0.0
    %v220 = vmax.f32 %v214, 0.0
    %v221 = vmax.f32 %v216, 0.0
    %v222 = vld [vmem:[#allocation2] sm:$0xff]
    %v223 = vld [vmem:[#allocation2 + $0x8] sm:$0xff]
    %v224 = vpack.c.bf16 %v220, %v218
    %v225 = vpack.c.bf16 %v221, %v219
    %v226 = vld [vmem:[#allocation6] sm:$0xf]
    %v227 = vld [vmem:[#allocation6 + $0x4] sm:$0xf]
    %v228 = vld [vmem:[#allocation6 + $0x8] sm:$0xf]
    %v229 = vld [vmem:[#allocation6 + $0xc] sm:$0xf]
    %v230 = vld [vmem:[#allocation6 + $0x10] sm:$0xf]
    %v231 = vld [vmem:[#allocation6 + $0x14] sm:$0xf]
    %v232 = vld [vmem:[#allocation6 + $0x18] sm:$0xf]
    %v233 = vld [vmem:[#allocation6 + $0x1c] sm:$0xf]
    %v234 = vld [vmem:[#allocation6 + $0x20] sm:$0xf]
    %v235 = vld [vmem:[#allocation6 + $0x24] sm:$0xf]
    %v236 = vld [vmem:[#allocation6 + $0x28] sm:$0xf]
    %v237 = vld [vmem:[#allocation6 + $0x2c] sm:$0xf]
    %v238 = vld [vmem:[#allocation6 + $0x30] sm:$0xf]
    %v239 = vld [vmem:[#allocation6 + $0x34] sm:$0xf]
    %v240 = vld [vmem:[#allocation6 + $0x38] sm:$0xf]
    %v241 = vld [vmem:[#allocation6 + $0x3c] sm:$0xf]
    %v242 = vld [vmem:[#allocation6 + $0x40] sm:$0xf]
    %v243 = vld [vmem:[#allocation6 + $0x44] sm:$0xf]
    %v244 = vld [vmem:[#allocation6 + $0x48] sm:$0xf]
    %v245 = vld [vmem:[#allocation6 + $0x4c] sm:$0xf]
    %v246 = vld [vmem:[#allocation6 + $0x50] sm:$0xf]
    %v247 = vld [vmem:[#allocation6 + $0x54] sm:$0xf]
    %v248 = vld [vmem:[#allocation6 + $0x58] sm:$0xf]
    %v249 = vld [vmem:[#allocation6 + $0x5c] sm:$0xf]
    %v250 = vld [vmem:[#allocation6 + $0x60] sm:$0xf]
    %v251 = vld [vmem:[#allocation6 + $0x64] sm:$0xf]
    %v252 = vld [vmem:[#allocation6 + $0x68] sm:$0xf]
    %v253 = vld [vmem:[#allocation6 + $0x6c] sm:$0xf]
    %v254 = vld [vmem:[#allocation6 + $0x70] sm:$0xf]
    %v255 = vld [vmem:[#allocation6 + $0x74] sm:$0xf]
    %v256 = vld [vmem:[#allocation6 + $0x78] sm:$0xf]
    %v257 = vld [vmem:[#allocation6 + $0x7c] sm:$0xf]
    %v290 = vunpack.c.l.b16 %v226
    %v291 = vunpack.c.l.b16 %v227
    %v292 = vunpack.c.l.b16 %v228
    %v293 = vunpack.c.l.b16 %v229
    %v294 = vunpack.c.l.b16 %v230
    %v295 = vunpack.c.l.b16 %v231
    %v296 = vunpack.c.l.b16 %v232
    %v297 = vunpack.c.l.b16 %v233
    %v298 = vunpack.c.l.b16 %v234
    %v299 = vunpack.c.l.b16 %v235
    %v300 = vunpack.c.l.b16 %v236
    %v301 = vunpack.c.l.b16 %v237
    %v302 = vunpack.c.l.b16 %v238
    %v303 = vunpack.c.l.b16 %v239
    %v304 = vunpack.c.l.b16 %v240
    %v305 = vunpack.c.l.b16 %v241
    %v306 = vunpack.c.l.b16 %v242
    %v307 = vunpack.c.l.b16 %v243
    %v308 = vunpack.c.l.b16 %v244
    %v309 = vunpack.c.l.b16 %v245
    %v310 = vunpack.c.l.b16 %v246
    %v311 = vunpack.c.l.b16 %v247
    %v312 = vunpack.c.l.b16 %v248
    %v313 = vunpack.c.l.b16 %v249
    %v314 = vunpack.c.l.b16 %v250
    %v315 = vunpack.c.l.b16 %v251
    %v316 = vunpack.c.l.b16 %v252
    %v317 = vunpack.c.l.b16 %v253
    %v318 = vunpack.c.l.b16 %v254
    %v319 = vunpack.c.l.b16 %v255
    %v320 = vunpack.c.l.b16 %v256
    %v321 = vunpack.c.l.b16 %v257
    %v322 = vpack.c.b16 %v291, %v290
    %v323 = vpack.c.b16 %v293, %v292
    %v324 = vpack.c.b16 %v295, %v294
    %v325 = vpack.c.b16 %v297, %v296
    %v326 = vpack.c.b16 %v299, %v298
    %v327 = vpack.c.b16 %v301, %v300
    %v328 = vpack.c.b16 %v303, %v302
    %v329 = vpack.c.b16 %v305, %v304
    %v330 = vpack.c.b16 %v307, %v306
    %v331 = vpack.c.b16 %v309, %v308
    %v332 = vpack.c.b16 %v311, %v310
    %v333 = vpack.c.b16 %v313, %v312
    %v334 = vpack.c.b16 %v315, %v314
    %v335 = vpack.c.b16 %v317, %v316
    %v336 = vpack.c.b16 %v319, %v318
    %v337 = vpack.c.b16 %v321, %v320
    %354 = vmatprep.subr.bf16.mxu0 0
    %355 = vmatpush1.bf16.msra.mxu0 %v322
    %356 = vmatprep.subr.bf16.mxu0 0
    %357 = vmatpush1.bf16.msra.mxu0 %v323
    %358 = vmatprep.subr.bf16.mxu0 0
    %359 = vmatpush1.bf16.msra.mxu0 %v324
    %360 = vmatprep.subr.bf16.mxu0 0
    %361 = vmatpush1.bf16.msra.mxu0 %v325
    %362 = vmatprep.subr.bf16.mxu0 0
    %363 = vmatpush1.bf16.msra.mxu0 %v326
    %364 = vmatprep.subr.bf16.mxu0 0
    %365 = vmatpush1.bf16.msra.mxu0 %v327
    %366 = vmatprep.subr.bf16.mxu0 0
    %367 = vmatpush1.bf16.msra.mxu0 %v328
    %368 = vmatprep.subr.bf16.mxu0 0
    %369 = vmatpush1.bf16.msra.mxu0 %v329
    %370 = vmatprep.subr.bf16.mxu0 0
    %371 = vmatpush1.bf16.msra.mxu0 %v330
    %372 = vmatprep.subr.bf16.mxu0 0
    %373 = vmatpush1.bf16.msra.mxu0 %v331
    %374 = vmatprep.subr.bf16.mxu0 0
    %375 = vmatpush1.bf16.msra.mxu0 %v332
    %376 = vmatprep.subr.bf16.mxu0 0
    %377 = vmatpush1.bf16.msra.mxu0 %v333
    %378 = vmatprep.subr.bf16.mxu0 0
    %379 = vmatpush1.bf16.msra.mxu0 %v334
    %380 = vmatprep.subr.bf16.mxu0 0
    %381 = vmatpush1.bf16.msra.mxu0 %v335
    %382 = vmatprep.subr.bf16.mxu0 0
    %383 = vmatpush1.bf16.msra.mxu0 %v336
    %384 = vmatprep.subr.bf16.mxu0 0
    %385 = vmatpush1.bf16.msra.mxu0 %v337
    %386 = vmatprep.mubr.bf16.mxu0 %v225
    %387 = vmatmul.mubr.bf16.gmra.mrb[0].mxu0 %v224
    %v388 = vpop.f32.mrb[0].mxu0
    %v389 = vadd.f32 0.0, %v388
    %v390 = vpop.f32.mrb[0].mxu0
    %v391 = vpop.f32.mrb[0].mxu0
    %v392 = vadd.f32 0.0, %v391
    %v393 = vpop.f32.mrb[0].mxu0
    %394 = vdwg.mxu0
    %v395 = vadd.f32 %v222, %v389
    %v396 = vadd.f32 %v223, %v392
    %397 = vst [vmem:[#allocation2] sm:$0xff] %v395
    %398 = vst [vmem:[#allocation2 + $0x8] sm:$0xff] %v396
    // Predicated region
    $region38: #{tpu_custom_call.1} parent=1 // pred_check
      %p399 = pneg %p53
    $region39: #{tpu_custom_call.1} parent=1 // pred_check_branch
      %401 = sbr.rel (%p399) target = $region41
    $region40: #{tpu_custom_call.1} parent=1 // pred_region
      %v402 = vld [vmem:[#allocation2] sm:$0xff]
      %v403 = vld [vmem:[#allocation2 + $0x8] sm:$0xff]
      %v404 = vld [vmem:[%s5] sm:$0x1]
      %v406 = vlaneseq
      %v407 = vshrl.u32 %v406, 7
      %v408 = vsub.s32 0, %v407
      %v409 = vrot.slane %v404, %v408
      %v411 = vadd.f32 %v402, %v409
      %v412 = vadd.f32 %v403, %v409
      %v413 = vmax.f32 %v411, 0.0
      %v414 = vmax.f32 %v412, 0.0
      %v415 = vld [vmem:[%s1] sm:$0xff]
      %v416 = vld [vmem:[%s1 + $0x8] sm:$0xff]
      %418 = vset.pattern.permute.xlu0 0
      %419 = vperm.xlu0 %418, %v415
      %v420 = vpop.permute.xlu0 %419
      %423 = vset.pattern.permute.xlu0 0
      %424 = vperm.xlu0 %423, %v416
      %v425 = vpop.permute.xlu0 %424
      %v427 = vmul.f32 %v413, %v420
      %v428 = vmul.f32 %v414, %v425
      %429 = vst [vmem:[#allocation8] sm:$0xff] %v427
      %430 = vst [vmem:[#allocation8 + $0x8] sm:$0xff] %v428
    $region41: #{tpu_custom_call.1} parent=1 // pred_fallthru
      _
    // Predicated region
    $region42: #{tpu_custom_call.1} parent=1 // pred_check
      _
    $region43: #{tpu_custom_call.1} parent=1 // pred_check_branch
      %432 = sbr.rel (0) target = $region45
    $region44: #{tpu_custom_call.1} parent=1 // pred_region
      %s434 = ssub.s32 256, 256
      %435 = vsyncadd [#allocation5], %s434
      %s436 = sshll.u32 [#allocation8], 4
      %s437 = int_to_ptr.vmem [resolvable:$true] %s436
      %442 = dma.vmem_to_hbm [thread:$0]  %s437, 256, %s6, [#allocation5], 128, 128, 8
    $region45: #{tpu_custom_call.1} parent=1 // pred_fallthru
      _
    // Predicated region
    $region46: #{tpu_custom_call.1} parent=1 // pred_check
      _
    $region47: #{tpu_custom_call.1} parent=1 // pred_check_branch
      %444 = sbr.rel (0) target = $region49
    $region48: #{tpu_custom_call.1} parent=1 // pred_region
      %445 = dma.done [#allocation5], 256
    $region49: #{tpu_custom_call.1} parent=1 // pred_fallthru
      _
    %446 = vsyncpa [#allocation4], 1
    %447 = vsyncpa [#allocation7], 1
    %448 = vsyncpa [#allocation5], 1

</llo_original>
